<compile_context>
chip_gen: v5e
topology: v5e:2x2
jax: 0.10.0
libtpu: 0.0.40
codegen_flags: <defaults>
</compile_context>

<pallas_src>
import functools

import jax
import jax.numpy as jnp
import numpy as np
from jax import lax
from jax.experimental import pallas as pl
from jax.experimental.pallas import tpu as pltpu


def _interp2_kernel(v_ref, xq_ref, yq_ref, o_ref, *, channels, height, width, clamp):
    tq = xq_ref.shape[-1]
    v = v_ref[0]          # (C*H, W) float32
    xq = xq_ref[0]        # (1, TQ)  float32
    yq = yq_ref[0]        # (1, TQ)  float32

    if clamp:
        xq = jnp.clip(xq, 0.0, float(width - 1))
        yq = jnp.clip(yq, 0.0, float(height - 1))

    # Corner coordinates (matching torch: floor -> long -> clamp).
    x0 = jnp.clip(jnp.floor(xq).astype(jnp.int32), 0, width - 1)
    y0 = jnp.clip(jnp.floor(yq).astype(jnp.int32), 0, height - 1)
    x1 = jnp.clip(x0 + 1, 0, width - 1)
    y1 = jnp.clip(y0 + 1, 0, height - 1)

    # Fractional offsets use the clamped floor (as in the reference module).
    fx = xq - x0.astype(jnp.float32)        # (1, TQ)
    fy = yq - y0.astype(jnp.float32)        # (1, TQ)

    zero = jnp.zeros((), jnp.float32)

    # Separable bilinear weights.  When x0 == x1 (boundary clamp) the two
    # contributions add to (1-fx)+fx = 1, matching the reference's
    # gather-twice-then-sum behaviour.  Same for y.
    x_iota = lax.broadcasted_iota(jnp.int32, (width, tq), 0)
    kxt = (jnp.where(x_iota == x0, 1.0 - fx, zero)
           + jnp.where(x_iota == x1, fx, zero))             # (W, TQ)
    y_iota = lax.broadcasted_iota(jnp.int32, (height, tq), 0)
    kyt = (jnp.where(y_iota == y0, 1.0 - fy, zero)
           + jnp.where(y_iota == y1, fy, zero))             # (H, TQ)

    if not clamp:
        # Fold out-of-bounds zeroing directly into the x-weights.
        valid = jnp.logical_not(
            (xq < 0.0) | (xq >= float(width)) | (yq < 0.0) | (yq >= float(height))
        ).astype(jnp.float32)                               # (1, TQ)
        kxt = kxt * valid

    # Stage 1 (MXU): contract over W.   (C*H, W) @ (W, TQ) -> (C*H, TQ)
    t = jnp.dot(v, kxt, preferred_element_type=jnp.float32)
    # Stage 2 (VPU/XLU): weighted reduction over H.
    t = t.reshape(channels, height, tq)                     # (C, H, TQ)
    out = jnp.sum(t * kyt[None, :, :], axis=1)              # (C, TQ)

    o_ref[0] = out.astype(o_ref.dtype)


def interp2(v, xq, yq, clamp=False):
    """v: (B, C, H, W); xq, yq: (B, H, W). Returns (B, C, H, W), like Interp2."""
    b, c, h, w = v.shape
    hw = h * w

    # Lane-dense query tiles: multiple of 128 (v5e MXU), 256 preferred (v6e/v7x).
    tq = 128 if hw <= 128 else 256
    nq = (hw + tq - 1) // tq
    hw_pad = nq * tq

    v_flat = v.reshape(b, c * h, w).astype(jnp.float32)          # channel-major, no transpose
    xq_flat = xq.reshape(b, 1, hw).astype(jnp.float32)           # lane-dense queries
    yq_flat = yq.reshape(b, 1, hw).astype(jnp.float32)
    if hw_pad != hw:
        pad = ((0, 0), (0, 0), (0, hw_pad - hw))
        xq_flat = jnp.pad(xq_flat, pad)
        yq_flat = jnp.pad(yq_flat, pad)

    kernel = functools.partial(
        _interp2_kernel, channels=c, height=h, width=w, clamp=clamp)

    flops = 2 * b * (c * h) * w * hw_pad + 2 * b * c * h * hw_pad
    bytes_accessed = 4 * (v_flat.size + xq_flat.size + yq_flat.size + b * c * hw_pad)

    out = pl.pallas_call(
        kernel,
        out_shape=jax.ShapeDtypeStruct((b, c, hw_pad), jnp.float32),
        grid_spec=pltpu.PrefetchScalarGridSpec(
            num_scalar_prefetch=0,
            grid=(b, nq),
            in_specs=[
                pl.BlockSpec((1, c * h, w), lambda bi, qi: (bi, 0, 0)),
                pl.BlockSpec((1, 1, tq), lambda bi, qi: (bi, 0, qi)),
                pl.BlockSpec((1, 1, tq), lambda bi, qi: (bi, 0, qi)),
            ],
            out_specs=pl.BlockSpec((1, c, tq), lambda bi, qi: (bi, 0, qi)),
        ),
        compiler_params=pltpu.CompilerParams(
            dimension_semantics=("parallel", "parallel"),
            vmem_limit_bytes=32 * 1024 * 1024,
        ),
        cost_estimate=pl.CostEstimate(
            flops=flops, transcendentals=0, bytes_accessed=bytes_accessed),
    )(v_flat, xq_flat, yq_flat)

    return out[:, :, :hw].reshape(b, c, h, w)


def _interp2_reference(v, xq, yq, clamp=False):
    """Pure-JAX port of the PyTorch Interp2 forward (for correctness check)."""
    b, c, h, w = v.shape
    if clamp:
        xq = jnp.clip(xq, 0.0, w - 1)
        yq = jnp.clip(yq, 0.0, h - 1)
    x0 = jnp.clip(jnp.floor(xq).astype(jnp.int32), 0, w - 1)
    y0 = jnp.clip(jnp.floor(yq).astype(jnp.int32), 0, h - 1)
    x1 = jnp.clip(x0 + 1, 0, w - 1)
    y1 = jnp.clip(y0 + 1, 0, h - 1)
    fx = xq - x0.astype(jnp.float32)
    fy = yq - y0.astype(jnp.float32)

    v_bhwc = jnp.transpose(v, (0, 2, 3, 1))            # (B,H,W,C)
    bi = jnp.arange(b)[:, None, None]

    def gather(yy, xx):
        return v_bhwc[bi, yy, xx]                      # (B,H,W,C)

    w00 = ((1.0 - fy) * (1.0 - fx))[..., None]
    w01 = ((1.0 - fy) * fx)[..., None]
    w10 = (fy * (1.0 - fx))[..., None]
    w11 = (fy * fx)[..., None]
    vals = (gather(y0, x0) * w00 + gather(y0, x1) * w01
            + gather(y1, x0) * w10 + gather(y1, x1) * w11)
    if not clamp:
        invalid = ((xq < 0) | (xq >= w) | (yq < 0) | (yq >= h))[..., None].astype(
            jnp.float32)
        vals = (1.0 - invalid) * vals
    return jnp.transpose(vals, (0, 3, 1, 2))           # (B,C,H,W)


if __name__ == "__main__":
    key = jax.random.PRNGKey(0)
    kv, kx, ky = jax.random.split(key, 3)

    B, C, H, W = 2, 4, 16, 16
    v = jax.random.normal(kv, (B, C, H, W), dtype=jnp.float32)
    # Query coords deliberately include out-of-range values to exercise the
    # invalid-mask path of the non-clamped forward.
    xq = jax.random.uniform(kx, (B, H, W), minval=-2.0, maxval=W + 1.0)
    yq = jax.random.uniform(ky, (B, H, W), minval=-2.0, maxval=H + 1.0)

    # Non-clamped path (out-of-range queries produce zeros).
    out = jax.block_until_ready(interp2(v, xq, yq, clamp=False))
    ref = jax.block_until_ready(_interp2_reference(v, xq, yq, clamp=False))
    np.testing.assert_allclose(np.asarray(out), np.asarray(ref), rtol=1e-5, atol=1e-5)
    assert out.shape == (B, C, H, W)

    # Clamped path.
    out_c = jax.block_until_ready(interp2(v, xq, yq, clamp=True))
    ref_c = jax.block_until_ready(_interp2_reference(v, xq, yq, clamp=True))
    np.testing.assert_allclose(np.asarray(out_c), np.asarray(ref_c), rtol=1e-5, atol=1e-5)

    print("KERNEL_OK")
</pallas_src>

<mosaic_0001>
module attributes {stable_mosaic.version = 11 : i64} {
  func.func @_interp2_kernel(%arg0: i32, %arg1: i32, %arg2: memref<1x64x16xf32, #tpu.memory_space<vmem>>, %arg3: memref<1x1x256xf32, #tpu.memory_space<vmem>>, %arg4: memref<1x1x256xf32, #tpu.memory_space<vmem>>, %arg5: memref<1x4x256xf32, #tpu.memory_space<vmem>>) attributes {dimension_semantics = [#tpu.dimension_semantics<parallel>, #tpu.dimension_semantics<parallel>], iteration_bounds = array<i64: 2, 1>, scalar_prefetch = 0 : i64, scratch_operands = 0 : i64, tpu.core_type = #tpu.core_type<tc>, window_params = [{transform_indices = @transform_0, window_bounds = array<i64: 1, 64, 16>}, {transform_indices = @transform_1, window_bounds = array<i64: 1, 1, 256>}, {transform_indices = @transform_2, window_bounds = array<i64: 1, 1, 256>}, {transform_indices = @transform_3, window_bounds = array<i64: 1, 4, 256>}]} {
    %c0 = arith.constant 0 : index
    %c0_0 = arith.constant 0 : index
    %c0_1 = arith.constant 0 : index
    %0 = vector.load %arg2[%c0, %c0_0, %c0_1] : memref<1x64x16xf32, #tpu.memory_space<vmem>>, vector<1x64x16xf32>
    %1 = vector.shape_cast %0 : vector<1x64x16xf32> to vector<64x16xf32>
    %c0_2 = arith.constant 0 : index
    %c0_3 = arith.constant 0 : index
    %c0_4 = arith.constant 0 : index
    %2 = vector.load %arg3[%c0_2, %c0_3, %c0_4] : memref<1x1x256xf32, #tpu.memory_space<vmem>>, vector<1x1x256xf32>
    %3 = vector.shape_cast %2 : vector<1x1x256xf32> to vector<1x256xf32>
    %c0_5 = arith.constant 0 : index
    %c0_6 = arith.constant 0 : index
    %c0_7 = arith.constant 0 : index
    %4 = vector.load %arg4[%c0_5, %c0_6, %c0_7] : memref<1x1x256xf32, #tpu.memory_space<vmem>>, vector<1x1x256xf32>
    %5 = vector.shape_cast %4 : vector<1x1x256xf32> to vector<1x256xf32>
    %6 = math.floor %3 : vector<1x256xf32>
    %7 = arith.fptosi %6 : vector<1x256xf32> to vector<1x256xi32>
    %c0_i32 = arith.constant 0 : i32
    %c15_i32 = arith.constant 15 : i32
    %8 = vector.broadcast %c0_i32 : i32 to vector<1x256xi32>
    %9 = arith.maxsi %8, %7 : vector<1x256xi32>
    %10 = vector.broadcast %c15_i32 : i32 to vector<1x256xi32>
    %11 = arith.minsi %10, %9 : vector<1x256xi32>
    %12 = math.floor %5 : vector<1x256xf32>
    %13 = arith.fptosi %12 : vector<1x256xf32> to vector<1x256xi32>
    %c0_i32_8 = arith.constant 0 : i32
    %c15_i32_9 = arith.constant 15 : i32
    %14 = vector.broadcast %c0_i32_8 : i32 to vector<1x256xi32>
    %15 = arith.maxsi %14, %13 : vector<1x256xi32>
    %16 = vector.broadcast %c15_i32_9 : i32 to vector<1x256xi32>
    %17 = arith.minsi %16, %15 : vector<1x256xi32>
    %c1_i32 = arith.constant 1 : i32
    %18 = vector.broadcast %c1_i32 : i32 to vector<1x256xi32>
    %19 = arith.addi %11, %18 : vector<1x256xi32>
    %c0_i32_10 = arith.constant 0 : i32
    %c15_i32_11 = arith.constant 15 : i32
    %20 = vector.broadcast %c0_i32_10 : i32 to vector<1x256xi32>
    %21 = arith.maxsi %20, %19 : vector<1x256xi32>
    %22 = vector.broadcast %c15_i32_11 : i32 to vector<1x256xi32>
    %23 = arith.minsi %22, %21 : vector<1x256xi32>
    %c1_i32_12 = arith.constant 1 : i32
    %24 = vector.broadcast %c1_i32_12 : i32 to vector<1x256xi32>
    %25 = arith.addi %17, %24 : vector<1x256xi32>
    %c0_i32_13 = arith.constant 0 : i32
    %c15_i32_14 = arith.constant 15 : i32
    %26 = vector.broadcast %c0_i32_13 : i32 to vector<1x256xi32>
    %27 = arith.maxsi %26, %25 : vector<1x256xi32>
    %28 = vector.broadcast %c15_i32_14 : i32 to vector<1x256xi32>
    %29 = arith.minsi %28, %27 : vector<1x256xi32>
    %30 = arith.sitofp %11 : vector<1x256xi32> to vector<1x256xf32>
    %31 = arith.subf %3, %30 : vector<1x256xf32>
    %32 = arith.sitofp %17 : vector<1x256xi32> to vector<1x256xf32>
    %33 = arith.subf %5, %32 : vector<1x256xf32>
    %34 = tpu.iota {dimensions = array<i32: 0>} : vector<16x256xi32>
    %35 = vector.broadcast %11 : vector<1x256xi32> to vector<16x256xi32>
    %36 = arith.cmpi eq, %34, %35 : vector<16x256xi32>
    %cst = arith.constant 1.000000e+00 : f32
    %37 = vector.broadcast %cst : f32 to vector<1x256xf32>
    %38 = arith.subf %37, %31 : vector<1x256xf32>
    %cst_15 = arith.constant 0.000000e+00 : f32
    %39 = vector.shape_cast %38 : vector<1x256xf32> to vector<1x256xf32>
    %40 = vector.broadcast %39 : vector<1x256xf32> to vector<16x256xf32>
    %41 = vector.broadcast %cst_15 : f32 to vector<16x256xf32>
    %42 = arith.select %36, %40, %41 : vector<16x256xi1>, vector<16x256xf32>
    %43 = vector.broadcast %23 : vector<1x256xi32> to vector<16x256xi32>
    %44 = arith.cmpi eq, %34, %43 : vector<16x256xi32>
    %cst_16 = arith.constant 0.000000e+00 : f32
    %45 = vector.shape_cast %31 : vector<1x256xf32> to vector<1x256xf32>
    %46 = vector.broadcast %45 : vector<1x256xf32> to vector<16x256xf32>
    %47 = vector.broadcast %cst_16 : f32 to vector<16x256xf32>
    %48 = arith.select %44, %46, %47 : vector<16x256xi1>, vector<16x256xf32>
    %49 = arith.addf %42, %48 : vector<16x256xf32>
    %50 = tpu.iota {dimensions = array<i32: 0>} : vector<16x256xi32>
    %51 = vector.broadcast %17 : vector<1x256xi32> to vector<16x256xi32>
    %52 = arith.cmpi eq, %50, %51 : vector<16x256xi32>
    %cst_17 = arith.constant 1.000000e+00 : f32
    %53 = vector.broadcast %cst_17 : f32 to vector<1x256xf32>
    %54 = arith.subf %53, %33 : vector<1x256xf32>
    %cst_18 = arith.constant 0.000000e+00 : f32
    %55 = vector.shape_cast %54 : vector<1x256xf32> to vector<1x256xf32>
    %56 = vector.broadcast %55 : vector<1x256xf32> to vector<16x256xf32>
    %57 = vector.broadcast %cst_18 : f32 to vector<16x256xf32>
    %58 = arith.select %52, %56, %57 : vector<16x256xi1>, vector<16x256xf32>
    %59 = vector.broadcast %29 : vector<1x256xi32> to vector<16x256xi32>
    %60 = arith.cmpi eq, %50, %59 : vector<16x256xi32>
    %cst_19 = arith.constant 0.000000e+00 : f32
    %61 = vector.shape_cast %33 : vector<1x256xf32> to vector<1x256xf32>
    %62 = vector.broadcast %61 : vector<1x256xf32> to vector<16x256xf32>
    %63 = vector.broadcast %cst_19 : f32 to vector<16x256xf32>
    %64 = arith.select %60, %62, %63 : vector<16x256xi1>, vector<16x256xf32>
    %65 = arith.addf %58, %64 : vector<16x256xf32>
    %cst_20 = arith.constant 0.000000e+00 : f32
    %66 = vector.broadcast %cst_20 : f32 to vector<1x256xf32>
    %67 = arith.cmpf olt, %3, %66 : vector<1x256xf32>
    %cst_21 = arith.constant 1.600000e+01 : f32
    %68 = vector.broadcast %cst_21 : f32 to vector<1x256xf32>
    %69 = arith.cmpf oge, %3, %68 : vector<1x256xf32>
    %70 = arith.ori %67, %69 : vector<1x256xi1>
    %cst_22 = arith.constant 0.000000e+00 : f32
    %71 = vector.broadcast %cst_22 : f32 to vector<1x256xf32>
    %72 = arith.cmpf olt, %5, %71 : vector<1x256xf32>
    %73 = arith.ori %70, %72 : vector<1x256xi1>
    %cst_23 = arith.constant 1.600000e+01 : f32
    %74 = vector.broadcast %cst_23 : f32 to vector<1x256xf32>
    %75 = arith.cmpf oge, %5, %74 : vector<1x256xf32>
    %76 = arith.ori %73, %75 : vector<1x256xi1>
    %cst_24 = arith.constant dense<true> : vector<1x256xi1>
    %77 = arith.xori %76, %cst_24 : vector<1x256xi1>
    %78 = arith.extui %77 : vector<1x256xi1> to vector<1x256xi32>
    %79 = arith.sitofp %78 : vector<1x256xi32> to vector<1x256xf32>
    %80 = vector.broadcast %79 : vector<1x256xf32> to vector<16x256xf32>
    %81 = arith.mulf %49, %80 : vector<16x256xf32>
    %cst_25 = arith.constant dense<0.000000e+00> : vector<64x256xf32>
    %82 = tpu.matmul %1, %81, %cst_25 {dimension_numbers = #tpu.dot_dimension_numbers<[1], [0], [0], [1], [0, 0, 1, 1], [], []>} : vector<64x16xf32>, vector<16x256xf32>, vector<64x256xf32> -> vector<64x256xf32>
    %83 = vector.shape_cast %82 : vector<64x256xf32> to vector<4x16x256xf32>
    %84 = vector.shape_cast %65 : vector<16x256xf32> to vector<1x16x256xf32>
    %85 = vector.broadcast %84 : vector<1x16x256xf32> to vector<4x16x256xf32>
    %86 = arith.mulf %83, %85 : vector<4x16x256xf32>
    %cst_26 = arith.constant dense<0.000000e+00> : vector<4x256xf32>
    %87 = vector.multi_reduction <add>, %86, %cst_26 [1] : vector<4x16x256xf32> to vector<4x256xf32>
    %c0_27 = arith.constant 0 : index
    %c0_28 = arith.constant 0 : index
    %c0_29 = arith.constant 0 : index
    %88 = vector.load %arg5[%c0_27, %c0_28, %c0_29] : memref<1x4x256xf32, #tpu.memory_space<vmem>>, vector<1x4x256xf32>
    %89 = vector.shape_cast %88 : vector<1x4x256xf32> to vector<4x256xf32>
    %90 = vector.shape_cast %87 : vector<4x256xf32> to vector<1x4x256xf32>
    tpu.vector_store %arg5[%c0_27, %c0_28, %c0_29], %90 {strides = array<i32>} : memref<1x4x256xf32, #tpu.memory_space<vmem>>, vector<1x4x256xf32>,
    return
  }
  func.func @transform_0(%arg0: i32, %arg1: i32) -> (i32, i32, i32) {
    %c0_i32 = arith.constant 0 : i32
    %c0_i32_0 = arith.constant 0 : i32
    %c0_i32_1 = arith.constant 0 : i32
    return %arg0, %c0_i32, %c0_i32_0 : i32, i32, i32
  }
  func.func @transform_1(%arg0: i32, %arg1: i32) -> (i32, i32, i32) {
    %c0_i32 = arith.constant 0 : i32
    %c0_i32_0 = arith.constant 0 : i32
    return %arg0, %c0_i32, %arg1 : i32, i32, i32
  }
  func.func @transform_2(%arg0: i32, %arg1: i32) -> (i32, i32, i32) {
    %c0_i32 = arith.constant 0 : i32
    %c0_i32_0 = arith.constant 0 : i32
    return %arg0, %c0_i32, %arg1 : i32, i32, i32
  }
  func.func @transform_3(%arg0: i32, %arg1: i32) -> (i32, i32, i32) {
    %c0_i32 = arith.constant 0 : i32
    %c0_i32_0 = arith.constant 0 : i32
    return %arg0, %c0_i32, %arg1 : i32, i32, i32
  }
}

</mosaic_0001>

<llo_original>
// kernel: tpu_custom_call.1
$region0: #{tpu_custom_call.1}
  #allocation0 [shape = 'u32[]', space=smem, size = 0x4, offset = 0x4, fixed_abs, tag = 'smem constant byte address 0x4 - core index']
  #allocation1 [shape = 'u32[72,128]{1,0:T(1,128)}', space=vmem, size = 0x9000, scoped, tag = 'internal scratch']
  %s0 = inlined_call_operand.vmem [shape: f32[2,64,16], index: 0, kind: input, shape index: {}]
  %s1 = inlined_call_operand.vmem [shape: f32[2,1,256], index: 1, kind: input, shape index: {}]
  %s2 = inlined_call_operand.vmem [shape: f32[2,1,256], index: 2, kind: input, shape index: {}]
  %s3 = inlined_call_operand.hbm [shape: f32[2,4,256], index: 3, kind: output, shape index: {}]
  %s4 = sld [smem:[#allocation0]]
  $region45: #{tpu_custom_call.1} parent=0
    _
  %s6 = ssub.s32 1, %s4
  %s7 = scalar_select 0, %s6, %s4
  $region1: #{tpu_custom_call.1} parent=0
    #allocation2 [shape = 'u8[8192]{0}', space=vmem, size = 0x2000, scoped, tag = 'output window, operand 0']
    #allocation3 [shape = 's32[2]{0}', space=sflag, size = 0x8, scoped, tag = 'scoped memory for tpu_custom_call.1']
    %8 = vsyncpa [#allocation3], 0
    %s9 = scalar_lea.sflag [#allocation3], 1
    %10 = vsyncpa %s9, 0
    loop: start=0, step=1, limit=4
    $region2: #{tpu_custom_call.1} parent=1 // loop_pre_header
      _
    $region3: #{tpu_custom_call.1} parent=1 // loop_header
      %s12 = sphi 0, %s16
      %p13 = scmp.ge.s32.totalorder %s12, 4
      %s19 = sphi 0, %s31
      %s20 = sphi 0, %s27
      %s21 = sphi 0, %s19
      %s22 = sphi 0, %s20
      %s23 = sphi 0, %s21
      %s24 = sphi 0, %s22
      %s34 = sphi 0, %s36
      %s37 = sphi 0, %s34
      %s38 = sphi 0, %s37
      %s54 = sphi 0, %s38
      %s62 = sphi 0, %s64
      %s65 = sphi 0, %s62
      %s66 = sphi 0, %s65
      %s82 = sphi 0, %s66
      %s90 = sphi 0, %s92
      %s93 = sphi 0, %s90
      %s94 = sphi 0, %s93
      %s110 = sphi 0, %s94
      %s118 = sphi 0, %s120
      %s121 = sphi 0, %s118
      %s122 = sphi 0, %s121
      %s138 = sphi 0, %s122
    $region4: #{tpu_custom_call.1} parent=1 // loop_header_branch
      %15 = sbr.rel (%p13) target = $region8
    $region5: #{tpu_custom_call.1} parent=1 // loop_body
      %s17 = ssub.s32 %s12, 1
      %s18 = ssub.s32 %s12, 2
      %s25 = sadd.s32 1, %s20
      %p26 = scmp.ge.s32.totalorder %s25, 1
      %s27 = scalar_select %p26, 0, %s25
      %s28 = sadd.s32 1, %s19
      %s29 = scalar_select %p26, %s28, %s19
      %p30 = scmp.ge.s32.totalorder %s29, 2
      %s31 = scalar_select %p30, 0, %s29
      %s32 = ssub.s32 %s19, %s31
      %p33 = scmp.eq.s32.totalorder %s32, 0
      %s35 = sadd.s32 %s34, 1
      %s36 = scalar_select %p33, %s34, %s35
      %p39 = pneg %p33
      %p40 = scmp.eq.s32.totalorder %s12, 1
      %p41 = por %p39, %p40
      %p42 = scmp.ne.s32.totalorder %s34, %s37
      %p43 = scmp.eq.s32.totalorder %s12, 0
      %p44 = por %p42, %p43
      %p45 = scmp.ne.s32.totalorder %s34, %s37
      %p46 = scmp.eq.s32.totalorder %s17, 1
      %p47 = por %p45, %p46
      %p48 = scmp.ne.s32.totalorder %s37, %s38
      %p49 = scmp.eq.s32.totalorder %s17, 0
      %p50 = por %p48, %p49
      %p51 = scmp.ne.s32.totalorder %s37, %s38
      %p52 = scmp.eq.s32.totalorder %s18, 1
      %p53 = por %p51, %p52
      %p55 = scmp.ne.s32.totalorder %s38, %s54
      %p56 = scmp.eq.s32.totalorder %s18, 0
      %p57 = por %p55, %p56
      %s58 = ssub.s32 %s19, %s31
      %s59 = ssub.s32 %s20, %s27
      %s60 = sor.u32 %s58, %s59
      %p61 = scmp.eq.s32.totalorder %s60, 0
      %s63 = sadd.s32 %s62, 1
      %s64 = scalar_select %p61, %s62, %s63
      %p67 = pneg %p61
      %p68 = scmp.eq.s32.totalorder %s12, 1
      %p69 = por %p67, %p68
      %p70 = scmp.ne.s32.totalorder %s62, %s65
      %p71 = scmp.eq.s32.totalorder %s12, 0
      %p72 = por %p70, %p71
      %p73 = scmp.ne.s32.totalorder %s62, %s65
      %p74 = scmp.eq.s32.totalorder %s17, 1
      %p75 = por %p73, %p74
      %p76 = scmp.ne.s32.totalorder %s65, %s66
      %p77 = scmp.eq.s32.totalorder %s17, 0
      %p78 = por %p76, %p77
      %p79 = scmp.ne.s32.totalorder %s65, %s66
      %p80 = scmp.eq.s32.totalorder %s18, 1
      %p81 = por %p79, %p80
      %p83 = scmp.ne.s32.totalorder %s66, %s82
      %p84 = scmp.eq.s32.totalorder %s18, 0
      %p85 = por %p83, %p84
      %s86 = ssub.s32 %s19, %s31
      %s87 = ssub.s32 %s20, %s27
      %s88 = sor.u32 %s86, %s87
      %p89 = scmp.eq.s32.totalorder %s88, 0
      %s91 = sadd.s32 %s90, 1
      %s92 = scalar_select %p89, %s90, %s91
      %p95 = pneg %p89
      %p96 = scmp.eq.s32.totalorder %s12, 1
      %p97 = por %p95, %p96
      %p98 = scmp.ne.s32.totalorder %s90, %s93
      %p99 = scmp.eq.s32.totalorder %s12, 0
      %p100 = por %p98, %p99
      %p101 = scmp.ne.s32.totalorder %s90, %s93
      %p102 = scmp.eq.s32.totalorder %s17, 1
      %p103 = por %p101, %p102
      %p104 = scmp.ne.s32.totalorder %s93, %s94
      %p105 = scmp.eq.s32.totalorder %s17, 0
      %p106 = por %p104, %p105
      %p107 = scmp.ne.s32.totalorder %s93, %s94
      %p108 = scmp.eq.s32.totalorder %s18, 1
      %p109 = por %p107, %p108
      %p111 = scmp.ne.s32.totalorder %s94, %s110
      %p112 = scmp.eq.s32.totalorder %s18, 0
      %p113 = por %p111, %p112
      %s114 = ssub.s32 %s19, %s31
      %s115 = ssub.s32 %s20, %s27
      %s116 = sor.u32 %s114, %s115
      %p117 = scmp.eq.s32.totalorder %s116, 0
      %s119 = sadd.s32 %s118, 1
      %s120 = scalar_select %p117, %s118, %s119
      %p123 = pneg %p117
      %p124 = scmp.eq.s32.totalorder %s12, 1
      %p125 = por %p123, %p124
      %p126 = scmp.ne.s32.totalorder %s118, %s121
      %p127 = scmp.eq.s32.totalorder %s12, 0
      %p128 = por %p126, %p127
      %p129 = scmp.ne.s32.totalorder %s118, %s121
      %p130 = scmp.eq.s32.totalorder %s17, 1
      %p131 = por %p129, %p130
      %p132 = scmp.ne.s32.totalorder %s121, %s122
      %p133 = scmp.eq.s32.totalorder %s17, 0
      %p134 = por %p132, %p133
      %p135 = scmp.ne.s32.totalorder %s121, %s122
      %p136 = scmp.eq.s32.totalorder %s18, 1
      %p137 = por %p135, %p136
      %p139 = scmp.ne.s32.totalorder %s122, %s138
      %p140 = scmp.eq.s32.totalorder %s18, 0
      %p141 = por %p139, %p140
      %p142 = scmp.le.s32.totalorder 1, %s12
      %p143 = scmp.lt.s32.totalorder %s12, 3
      %p144 = pnand %p142, %p143
      %p145 = pneg %p144
      // Predicated region
      $region9: #{tpu_custom_call.1} parent=5 // pred_check
        _
      $region10: #{tpu_custom_call.1} parent=5 // pred_check_branch
        %147 = sbr.rel (%p144) target = $region12
      $region11: #{tpu_custom_call.1} parent=5 // pred_region
        %s148 = ssub.s32 %s12, 1
      $region12: #{tpu_custom_call.1} parent=5 // pred_fallthru
        _
      %p149 = scmp.lt.s32.totalorder %s12, 2
      // Predicated region
      $region13: #{tpu_custom_call.1} parent=5 // pred_check
        %p150 = pneg %p149
      $region14: #{tpu_custom_call.1} parent=5 // pred_check_branch
        %152 = sbr.rel (%p150) target = $region16
      $region15: #{tpu_custom_call.1} parent=5 // pred_region
        // Predicated region
        $region17: #{tpu_custom_call.1} parent=15 // pred_check
          %p153 = pneg %p44
        $region18: #{tpu_custom_call.1} parent=15 // pred_check_branch
          %155 = sbr.rel (%p153) target = $region20
        $region19: #{tpu_custom_call.1} parent=15 // pred_region
          %p156 = scmp.lt.s32.totalorder %s19, 1
          %s157 = scalar_select %p156, %s19, 1
          %s158 = smul.addr %s157, 8
          %s159 = smul.addr %s158, 8
          %s160 = scalar_lea.vmem %s0, %s159
        $region20: #{tpu_custom_call.1} parent=15 // pred_fallthru
          _
        // Predicated region
        $region21: #{tpu_custom_call.1} parent=15 // pred_check
          %p161 = pneg %p72
        $region22: #{tpu_custom_call.1} parent=15 // pred_check_branch
          %163 = sbr.rel (%p161) target = $region24
        $region23: #{tpu_custom_call.1} parent=15 // pred_region
          %s164 = smul.u32 2, %s20
          %p165 = scmp.lt.s32.totalorder %s19, 1
          %s166 = scalar_select %p165, %s19, 1
          %p167 = scmp.lt.s32.totalorder %s164, 1
          %s168 = scalar_select %p167, %s164, 1
          %s169 = smul.addr %s166, 2
          %s170 = sadd.s32 %s168, %s169
          %s171 = scalar_lea.vmem %s1, %s170
          %s172 = smul.u32 2, %s20
        $region24: #{tpu_custom_call.1} parent=15 // pred_fallthru
          _
        // Predicated region
        $region25: #{tpu_custom_call.1} parent=15 // pred_check
          %p173 = pneg %p100
        $region26: #{tpu_custom_call.1} parent=15 // pred_check_branch
          %175 = sbr.rel (%p173) target = $region28
        $region27: #{tpu_custom_call.1} parent=15 // pred_region
          %s176 = smul.u32 2, %s20
          %p177 = scmp.lt.s32.totalorder %s19, 1
          %s178 = scalar_select %p177, %s19, 1
          %p179 = scmp.lt.s32.totalorder %s176, 1
          %s180 = scalar_select %p179, %s176, 1
          %s181 = smul.addr %s178, 2
          %s182 = sadd.s32 %s180, %s181
          %s183 = scalar_lea.vmem %s2, %s182
          %s184 = smul.u32 2, %s20
        $region28: #{tpu_custom_call.1} parent=15 // pred_fallthru
          _
      $region16: #{tpu_custom_call.1} parent=5 // pred_fallthru
        _
      %p185 = scmp.le.s32.totalorder 1, %s12
      %p186 = scmp.lt.s32.totalorder %s12, 3
      %p187 = pnand %p185, %p186
      %p188 = pneg %p187
      // Predicated region
      $region29: #{tpu_custom_call.1} parent=5 // pred_check
        _
      $region30: #{tpu_custom_call.1} parent=5 // pred_check_branch
        %190 = sbr.rel (%p187) target = $region32
      $region31: #{tpu_custom_call.1} parent=5 // pred_region
        %s191 = ssub.s32 %s12, 1
        %p192 = scmp.lt.s32.totalorder %s21, 1
        %s193 = scalar_select %p192, %s21, 1
        %s194 = smul.addr %s193, 8
        %s195 = smul.addr %s194, 8
        %s196 = scalar_lea.vmem %s0, %s195
        %p197 = pneg %p50
        %p198 = pneg %p47
        %s199 = smul.u32 2, %s22
        %p200 = scmp.lt.s32.totalorder %s21, 1
        %s201 = scalar_select %p200, %s21, 1
        %p202 = scmp.lt.s32.totalorder %s199, 1
        %s203 = scalar_select %p202, %s199, 1
        %s204 = smul.addr %s201, 2
        %s205 = sadd.s32 %s203, %s204
        %s206 = scalar_lea.vmem %s1, %s205
        %p207 = pneg %p78
        %p208 = pneg %p75
        %s209 = smul.u32 2, %s22
        %p210 = scmp.lt.s32.totalorder %s21, 1
        %s211 = scalar_select %p210, %s21, 1
        %p212 = scmp.lt.s32.totalorder %s209, 1
        %s213 = scalar_select %p212, %s209, 1
        %s214 = smul.addr %s211, 2
        %s215 = sadd.s32 %s213, %s214
        %s216 = scalar_lea.vmem %s2, %s215
        %p217 = pneg %p106
        %p218 = pneg %p103
        %p219 = pneg %p134
        %p220 = pneg %p131
        %s221 = sand.u32 %s121, 1
        %s222 = scalar_lea.sflag [#allocation3], %s221
        %s223 = sand.u32 %s121, 1
        %s224 = smul.addr %s223, 8
        %s225 = scalar_lea.vmem [#allocation2], %s224
        %p226 = scmp.lt.s32.totalorder %s21, 1
        %s227 = scalar_select %p226, %s21, 1
        %s228 = smul.addr %s227, 8
        %s229 = smul.addr %s228, 8
        %s230 = scalar_lea.vmem %s0, %s229
        %s231 = smul.u32 2, %s22
        %p232 = scmp.lt.s32.totalorder %s21, 1
        %s233 = scalar_select %p232, %s21, 1
        %p234 = scmp.lt.s32.totalorder %s231, 1
        %s235 = scalar_select %p234, %s231, 1
        %s236 = smul.addr %s233, 2
        %s237 = sadd.s32 %s235, %s236
        %s238 = scalar_lea.vmem %s1, %s237
        %s239 = smul.u32 2, %s22
        %s240 = smul.u32 2, %s22
        %p241 = scmp.lt.s32.totalorder %s21, 1
        %s242 = scalar_select %p241, %s21, 1
        %p243 = scmp.lt.s32.totalorder %s240, 1
        %s244 = scalar_select %p243, %s240, 1
        %s245 = smul.addr %s242, 2
        %s246 = sadd.s32 %s244, %s245
        %s247 = scalar_lea.vmem %s2, %s246
        %s248 = smul.u32 2, %s22
        %s249 = smul.u32 2, %s22
        %v250 = vld [vmem:[%s230] sm:$0xff]
        %v251 = vld [vmem:[%s230 + $0x8] sm:$0xff]
        %v252 = vld [vmem:[%s230 + $0x10] sm:$0xff]
        %v253 = vld [vmem:[%s230 + $0x18] sm:$0xff]
        %v254 = vld [vmem:[%s230 + $0x20] sm:$0xff]
        %v255 = vld [vmem:[%s230 + $0x28] sm:$0xff]
        %v256 = vld [vmem:[%s230 + $0x30] sm:$0xff]
        %v257 = vld [vmem:[%s230 + $0x38] sm:$0xff]
        %v258 = vld [vmem:[%s238] sm:$0x3]
        %v259 = vld [vmem:[%s247] sm:$0x3]
        %v260 = vfloor.f32 %v258
        %v261 = vcvt.f32.s32.to.zero.pseudo %v260
        %vm262 = vcmp.gt.s32.totalorder %v261, 0
        %v263 = vsel %vm262, %v261, 0
        %vm264 = vcmp.lt.s32.totalorder %v263, 15
        %v265 = vsel %vm264, %v263, 15
        %v266 = vfloor.f32 %v259
        %v267 = vcvt.f32.s32.to.zero.pseudo %v266
        %vm268 = vcmp.gt.s32.totalorder %v267, 0
        %v269 = vsel %vm268, %v267, 0
        %vm270 = vcmp.lt.s32.totalorder %v269, 15
        %v271 = vsel %vm270, %v269, 15
        %v272 = vadd.s32 %v265, 1
        %vm273 = vcmp.gt.s32.totalorder %v272, 0
        %v274 = vsel %vm273, %v272, 0
        %vm275 = vcmp.lt.s32.totalorder %v274, 15
        %v276 = vsel %vm275, %v274, 15
        %v277 = vadd.s32 %v271, 1
        %vm278 = vcmp.gt.s32.totalorder %v277, 0
        %v279 = vsel %vm278, %v277, 0
        %vm280 = vcmp.lt.s32.totalorder %v279, 15
        %v281 = vsel %vm280, %v279, 15
        %v282 = vcvt.s32.f32 %v265
        %v283 = vsub.f32 %v258, %v282
        %v284 = vcvt.s32.f32 %v271
        %v285 = vsub.f32 %v259, %v284
        %v286 = vlaneseq
        %v287 = vshrl.u32 %v286, 7
        %v288 = vadd.s32 %v287, 8
        %v289 = vperm.slane %v265, 0
        %v290 = vperm.slane %v265, 1
        %vm291 = vcmp.eq.s32.totalorder %v287, %v289
        %vm292 = vcmp.eq.s32.totalorder %v287, %v290
        %vm293 = vcmp.eq.s32.totalorder %v288, %v289
        %vm294 = vcmp.eq.s32.totalorder %v288, %v290
        %v295 = vsub.f32 1.0, %v283
        %v297 = vperm.slane %v295, 0
        %v298 = vperm.slane %v295, 1
        %v301 = vsel %vm291, %v297, 0.0
        %v302 = vsel %vm292, %v298, 0.0
        %v303 = vsel %vm293, %v297, 0.0
        %v304 = vsel %vm294, %v298, 0.0
        %v305 = vperm.slane %v276, 0
        %v306 = vperm.slane %v276, 1
        %vm307 = vcmp.eq.s32.totalorder %v287, %v305
        %vm308 = vcmp.eq.s32.totalorder %v287, %v306
        %vm309 = vcmp.eq.s32.totalorder %v288, %v305
        %vm310 = vcmp.eq.s32.totalorder %v288, %v306
        %v312 = vperm.slane %v283, 0
        %v313 = vperm.slane %v283, 1
        %v316 = vsel %vm307, %v312, 0.0
        %v317 = vsel %vm308, %v313, 0.0
        %v318 = vsel %vm309, %v312, 0.0
        %v319 = vsel %vm310, %v313, 0.0
        %v320 = vadd.f32 %v301, %v316
        %v321 = vadd.f32 %v302, %v317
        %v322 = vadd.f32 %v303, %v318
        %v323 = vadd.f32 %v304, %v319
        %v324 = vperm.slane %v271, 0
        %v325 = vperm.slane %v271, 1
        %vm326 = vcmp.eq.s32.totalorder %v287, %v324
        %vm327 = vcmp.eq.s32.totalorder %v287, %v325
        %vm328 = vcmp.eq.s32.totalorder %v288, %v324
        %vm329 = vcmp.eq.s32.totalorder %v288, %v325
        %v330 = vsub.f32 1.0, %v285
        %v332 = vperm.slane %v330, 0
        %v333 = vperm.slane %v330, 1
        %v336 = vsel %vm326, %v332, 0.0
        %v337 = vsel %vm327, %v333, 0.0
        %v338 = vsel %vm328, %v332, 0.0
        %v339 = vsel %vm329, %v333, 0.0
        %v340 = vperm.slane %v281, 0
        %v341 = vperm.slane %v281, 1
        %vm342 = vcmp.eq.s32.totalorder %v287, %v340
        %vm343 = vcmp.eq.s32.totalorder %v287, %v341
        %vm344 = vcmp.eq.s32.totalorder %v288, %v340
        %vm345 = vcmp.eq.s32.totalorder %v288, %v341
        %v347 = vperm.slane %v285, 0
        %v348 = vperm.slane %v285, 1
        %v351 = vsel %vm342, %v347, 0.0
        %v352 = vsel %vm343, %v348, 0.0
        %v353 = vsel %vm344, %v347, 0.0
        %v354 = vsel %vm345, %v348, 0.0
        %v355 = vadd.f32 %v336, %v351
        %v356 = vadd.f32 %v337, %v352
        %v357 = vadd.f32 %v338, %v353
        %v358 = vadd.f32 %v339, %v354
        %vm359 = vcmp.lt.f32.partialorder %v258, 0.0
        %vm360 = vcmp.ge.f32.partialorder %v258, 16.0
        %vm361 = vmor %vm359, %vm360
        %vm362 = vcmp.lt.f32.partialorder %v259, 0.0
        %vm363 = vmor %vm361, %vm362
        %vm364 = vcmp.ge.f32.partialorder %v259, 16.0
        %vm365 = vmor %vm363, %vm364
        %vm366 = vmxor %vm365, 1
        %v367 = vsel %vm366, 1, 0
        %v368 = vcvt.s32.f32 %v367
        %v370 = vperm.slane %v368, 0
        %v371 = vperm.slane %v368, 1
        %v374 = vmul.f32 %v320, %v370
        %v375 = vmul.f32 %v321, %v371
        %v376 = vmul.f32 %v322, %v370
        %v377 = vmul.f32 %v323, %v371
        %vm378 = vcmask 130048
        %v380 = vsel %vm378, %v250, 0
        %v383 = vsel %vm378, %v251, 0
        %v386 = vsel %vm378, %v252, 0
        %v389 = vsel %vm378, %v253, 0
        %v392 = vsel %vm378, %v254, 0
        %v395 = vsel %vm378, %v255, 0
        %v398 = vsel %vm378, %v256, 0
        %v401 = vsel %vm378, %v257, 0
        %403 = vmatpush.msra.mxu0 0.0
        %404 = vmatpush.msra.mxu0 0.0
        %405 = vmatpush.msra.mxu0 0.0
        %406 = vmatpush.msra.mxu0 0.0
        %407 = vmatpush.msra.mxu0 0.0
        %408 = vmatpush.msra.mxu0 0.0
        %409 = vmatpush.msra.mxu0 0.0
        %410 = vmatpush.msra.mxu0 0.0
        %411 = vmatpush.msra.mxu0 0.0
        %412 = vmatpush.msra.mxu0 0.0
        %413 = vmatpush.msra.mxu0 0.0
        %414 = vmatpush.msra.mxu0 0.0
        %415 = vmatpush.msra.mxu0 0.0
        %416 = vmatpush.msra.mxu0 0.0
        %417 = vmatpush.msra.mxu0 %v376
        %418 = vmatpush.msra.mxu0 %v374
        %419 = vmatmul.f32.gmra.mxu0 %v380
        %v420 = vpop.f32.mrf.mxu0
        %v421 = vadd.f32 0.0, %v420
        %422 = vmatmul.f32.gmra.mxu0 %v383
        %v423 = vpop.f32.mrf.mxu0
        %v424 = vadd.f32 0.0, %v423
        %425 = vmatmul.f32.gmra.mxu0 %v386
        %v426 = vpop.f32.mrf.mxu0
        %v427 = vadd.f32 0.0, %v426
        %428 = vmatmul.f32.gmra.mxu0 %v389
        %v429 = vpop.f32.mrf.mxu0
        %v430 = vadd.f32 0.0, %v429
        %431 = vmatmul.f32.gmra.mxu0 %v392
        %v432 = vpop.f32.mrf.mxu0
        %v433 = vadd.f32 0.0, %v432
        %434 = vmatmul.f32.gmra.mxu0 %v395
        %v435 = vpop.f32.mrf.mxu0
        %v436 = vadd.f32 0.0, %v435
        %437 = vmatmul.f32.gmra.mxu0 %v398
        %v438 = vpop.f32.mrf.mxu0
        %v439 = vadd.f32 0.0, %v438
        %440 = vmatmul.f32.gmra.mxu0 %v401
        %v441 = vpop.f32.mrf.mxu0
        %v442 = vadd.f32 0.0, %v441
        %443 = vdwg.mxu0
        %444 = vmatpush.msra.mxu0 0.0
        %445 = vmatpush.msra.mxu0 0.0
        %446 = vmatpush.msra.mxu0 0.0
        %447 = vmatpush.msra.mxu0 0.0
        %448 = vmatpush.msra.mxu0 0.0
        %449 = vmatpush.msra.mxu0 0.0
        %450 = vmatpush.msra.mxu0 0.0
        %451 = vmatpush.msra.mxu0 0.0
        %452 = vmatpush.msra.mxu0 0.0
        %453 = vmatpush.msra.mxu0 0.0
        %454 = vmatpush.msra.mxu0 0.0
        %455 = vmatpush.msra.mxu0 0.0
        %456 = vmatpush.msra.mxu0 0.0
        %457 = vmatpush.msra.mxu0 0.0
        %458 = vmatpush.msra.mxu0 %v377
        %459 = vmatpush.msra.mxu0 %v375
        %460 = vmatmul.f32.gmra.mxu0 %v380
        %v461 = vpop.f32.mrf.mxu0
        %v462 = vadd.f32 0.0, %v461
        %463 = vmatmul.f32.gmra.mxu0 %v383
        %v464 = vpop.f32.mrf.mxu0
        %v465 = vadd.f32 0.0, %v464
        %466 = vmatmul.f32.gmra.mxu0 %v386
        %v467 = vpop.f32.mrf.mxu0
        %v468 = vadd.f32 0.0, %v467
        %469 = vmatmul.f32.gmra.mxu0 %v389
        %v470 = vpop.f32.mrf.mxu0
        %v471 = vadd.f32 0.0, %v470
        %472 = vmatmul.f32.gmra.mxu0 %v392
        %v473 = vpop.f32.mrf.mxu0
        %v474 = vadd.f32 0.0, %v473
        %475 = vmatmul.f32.gmra.mxu0 %v395
        %v476 = vpop.f32.mrf.mxu0
        %v477 = vadd.f32 0.0, %v476
        %478 = vmatmul.f32.gmra.mxu0 %v398
        %v479 = vpop.f32.mrf.mxu0
        %v480 = vadd.f32 0.0, %v479
        %481 = vmatmul.f32.gmra.mxu0 %v401
        %v482 = vpop.f32.mrf.mxu0
        %v483 = vadd.f32 0.0, %v482
        %484 = vdwg.mxu0
        %v485 = vmul.f32 %v421, %v355
        %v486 = vmul.f32 %v462, %v356
        %v487 = vmul.f32 %v424, %v357
        %v488 = vmul.f32 %v465, %v358
        %v489 = vmul.f32 %v427, %v355
        %v490 = vmul.f32 %v468, %v356
        %v491 = vmul.f32 %v430, %v357
        %v492 = vmul.f32 %v471, %v358
        %v493 = vmul.f32 %v433, %v355
        %v494 = vmul.f32 %v474, %v356
        %v495 = vmul.f32 %v436, %v357
        %v496 = vmul.f32 %v477, %v358
        %v497 = vmul.f32 %v439, %v355
        %v498 = vmul.f32 %v480, %v356
        %v499 = vmul.f32 %v442, %v357
        %v500 = vmul.f32 %v483, %v358
        %v501 = vadd.f32 %v485, %v487
        %v502 = vrot.slane %v501, 4
        %v503 = vadd.f32 %v501, %v502
        %v504 = vrot.slane %v503, 2
        %v505 = vadd.f32 %v503, %v504
        %v506 = vrot.slane %v505, 1
        %v507 = vadd.f32 %v505, %v506
        %v508 = vadd.f32 %v486, %v488
        %v509 = vrot.slane %v508, 4
        %v510 = vadd.f32 %v508, %v509
        %v511 = vrot.slane %v510, 2
        %v512 = vadd.f32 %v510, %v511
        %v513 = vrot.slane %v512, 1
        %v514 = vadd.f32 %v512, %v513
        %v515 = vadd.f32 %v489, %v491
        %v516 = vrot.slane %v515, 4
        %v517 = vadd.f32 %v515, %v516
        %v518 = vrot.slane %v517, 2
        %v519 = vadd.f32 %v517, %v518
        %v520 = vrot.slane %v519, 1
        %v521 = vadd.f32 %v519, %v520
        %v522 = vadd.f32 %v490, %v492
        %v523 = vrot.slane %v522, 4
        %v524 = vadd.f32 %v522, %v523
        %v525 = vrot.slane %v524, 2
        %v526 = vadd.f32 %v524, %v525
        %v527 = vrot.slane %v526, 1
        %v528 = vadd.f32 %v526, %v527
        %v529 = vadd.f32 %v493, %v495
        %v530 = vrot.slane %v529, 4
        %v531 = vadd.f32 %v529, %v530
        %v532 = vrot.slane %v531, 2
        %v533 = vadd.f32 %v531, %v532
        %v534 = vrot.slane %v533, 1
        %v535 = vadd.f32 %v533, %v534
        %v536 = vadd.f32 %v494, %v496
        %v537 = vrot.slane %v536, 4
        %v538 = vadd.f32 %v536, %v537
        %v539 = vrot.slane %v538, 2
        %v540 = vadd.f32 %v538, %v539
        %v541 = vrot.slane %v540, 1
        %v542 = vadd.f32 %v540, %v541
        %v543 = vadd.f32 %v497, %v499
        %v544 = vrot.slane %v543, 4
        %v545 = vadd.f32 %v543, %v544
        %v546 = vrot.slane %v545, 2
        %v547 = vadd.f32 %v545, %v546
        %v548 = vrot.slane %v547, 1
        %v549 = vadd.f32 %v547, %v548
        %v550 = vadd.f32 %v498, %v500
        %v551 = vrot.slane %v550, 4
        %v552 = vadd.f32 %v550, %v551
        %v553 = vrot.slane %v552, 2
        %v554 = vadd.f32 %v552, %v553
        %v555 = vrot.slane %v554, 1
        %v556 = vadd.f32 %v554, %v555
        %v565 = vrot.slane %v514, 4
        %v566 = vrot.slane %v528, 4
        %v567 = vrot.slane %v542, 4
        %v568 = vrot.slane %v556, 4
        %vm569 = vcmask 1043456
        %v570 = vsel %vm569, %v507, %v565
        %v571 = vsel %vm569, %v521, %v566
        %v572 = vsel %vm569, %v535, %v567
        %v573 = vsel %vm569, %v549, %v568
        %v574 = vrot.slane %v571, 7
        %vm575 = vcmask 1041409
        %v576 = vsel %vm575, %v574, %v570
        %vm577 = vcmask 1045509
        %v578 = vsel %vm577, %v574, %v576
        %v579 = vrot.slane %v572, 6
        %vm580 = vcmask 1042434
        %v581 = vsel %vm580, %v579, %v578
        %vm582 = vcmask 1046534
        %v583 = vsel %vm582, %v579, %v581
        %v584 = vrot.slane %v573, 5
        %vm585 = vcmask 1043459
        %v586 = vsel %vm585, %v584, %v583
        %vm587 = vcmask 1047559
        %v588 = vsel %vm587, %v584, %v586
        %590 = vst [vmem:[%s225] sm:$0xff] %v588
        %s591 = sand.u32 %s121, 1
        %s592 = scalar_lea.sflag [#allocation3], %s591
        %s593 = sand.u32 %s121, 1
        %s594 = smul.addr %s593, 8
        %s595 = scalar_lea.vmem [#allocation2], %s594
        // Predicated region
        $region33: #{tpu_custom_call.1} parent=31 // pred_check
          %p596 = pneg %p131
        $region34: #{tpu_custom_call.1} parent=31 // pred_check_branch
          %598 = sbr.rel (%p596) target = $region36
        $region35: #{tpu_custom_call.1} parent=31 // pred_region
          %s599 = smul.u32 2, %s22
          %601 = vsyncadd %s592, 0
          %s602 = smul.addr %s21, 2
          %s603 = sadd.s32 %s599, %s602
          %s604 = smul.addr %s603, 4
          %s605 = scalar_lea.hbm %s3, %s604
          %s607 = sshll.u32 %s595, 4
          %s608 = int_to_ptr.vmem [resolvable:$true] %s607
          %s609 = sshll.u32 %s605, 4
          %s610 = int_to_ptr.hbm [resolvable:$true] %s609
          %612 = dma.vmem_to_hbm [thread:$0]  %s608, 128, %s610, %s592
        $region36: #{tpu_custom_call.1} parent=31 // pred_fallthru
          _
      $region32: #{tpu_custom_call.1} parent=5 // pred_fallthru
        _
      %p613 = scmp.le.s32.totalorder 2, %s12
      // Predicated region
      $region37: #{tpu_custom_call.1} parent=5 // pred_check
        %p614 = pneg %p613
      $region38: #{tpu_custom_call.1} parent=5 // pred_check_branch
        %616 = sbr.rel (%p614) target = $region40
      $region39: #{tpu_custom_call.1} parent=5 // pred_region
        %s617 = ssub.s32 %s12, 2
        // Predicated region
        $region41: #{tpu_custom_call.1} parent=39 // pred_check
          %p618 = pneg %p137
        $region42: #{tpu_custom_call.1} parent=39 // pred_check_branch
          %620 = sbr.rel (%p618) target = $region44
        $region43: #{tpu_custom_call.1} parent=39 // pred_region
          %s621 = sand.u32 %s122, 1
          %s622 = scalar_lea.sflag [#allocation3], %s621
          %s623 = sand.u32 %s122, 1
          %s624 = smul.addr %s623, 8
          %s625 = scalar_lea.vmem [#allocation2], %s624
          %627 = dma.done %s622, 128
        $region44: #{tpu_custom_call.1} parent=39 // pred_fallthru
          _
      $region40: #{tpu_custom_call.1} parent=5 // pred_fallthru
        _
    $region6: #{tpu_custom_call.1} parent=1 // loop_footer
      %s16 = sadd.s32 1, %s12
    $region7: #{tpu_custom_call.1} parent=1 // loop_footer_branch
      %11 = sbr.rel target = $region3
    $region8: #{tpu_custom_call.1} parent=1 // loop_exit
      _
    %628 = vsyncpa [#allocation3], 1
    %s629 = scalar_lea.sflag [#allocation3], 1
    %630 = vsyncpa %s629, 1

</llo_original>
